<compile_context>
chip_gen: v5e
topology: v5e:2x2
jax: 0.10.0
libtpu: 0.0.40
codegen_flags: <defaults>
</compile_context>

<pallas_src>
import jax
import jax.numpy as jnp
from jax.experimental import pallas as pl
from jax.experimental.pallas import tpu as pltpu


def logreg_kernel(x_ref, w_ref, b_ref, o_ref):
    # x_ref: (block_b, D) VMEM | w_ref: (1, D) VMEM | b_ref: (1,) SMEM | o_ref: (block_b, 1)
    # fc: GEMV as VPU broadcast-multiply + XLU lane reduction, f32 accumulation.
    z = jnp.sum(x_ref[...] * w_ref[...], axis=-1, keepdims=True) + b_ref[0]
    # sigmoid epilogue: exp + reciprocal land on the otherwise-idle EUP slot.
    o_ref[...] = jax.nn.sigmoid(z)


def _pick_block_b(B, D, *, x_budget_bytes=24 << 20, max_block_b=2048):
    """Largest batch tile whose double-buffered f32 x-tile fits the VMEM budget."""
    bytes_per_row = D * 4
    max_rows = max(8, (x_budget_bytes // (2 * bytes_per_row)) // 8 * 8)
    block_b = min(B, max_block_b, max_rows)
    # v7x megacore: give the "parallel" batch axis several grid steps, but never shrink
    # the tile below ~512 rows to get them (tile size dominates; no-op on v5e/v6e).
    while block_b >= 1024 and pl.cdiv(B, block_b) < 8:
        block_b //= 2
    if block_b < B:
        block_b = max(8, (block_b // 8) * 8)  # (8, 128) sublane rule for partial blocks
    return block_b


def logistic_regression_forward(x, weight, bias, *, block_b=None):
    """x: (B, dim_in) f32; weight: (1, dim_in) (PyTorch nn.Linear layout); bias: (1,)."""
    B, D = x.shape
    x = x.astype(jnp.float32)
    w_row = weight.reshape(1, D).astype(jnp.float32)   # keep (out=1, in=D): lane-dense row
    b_vec = bias.reshape(1).astype(jnp.float32)        # scalar bias for SMEM

    if block_b is None:
        block_b = _pick_block_b(B, D)
    block_b = min(block_b, B)

    # Pad the batch to a whole number of tiles (ragged tail handled by padding).
    n_steps = pl.cdiv(B, block_b)
    padded_B = n_steps * block_b
    if padded_B != B:
        x = jnp.pad(x, ((0, padded_B - B), (0, 0)))

    # VMEM accounting (f32): double-buffered x tile + double-buffered (lane-padded)
    # output tile + the resident (1, D) weight row (pads to 8 sublanes).
    x_bytes = 2 * block_b * D * 4
    out_bytes = 2 * block_b * 128 * 4
    w_bytes = 8 * max(D, 128) * 4
    vmem_limit = int(1.5 * (x_bytes + out_bytes + w_bytes)) + (1 << 20)
    vmem_limit = max(16 << 20, min(vmem_limit, 48 << 20))  # headroom, still under v7x's 64 MiB

    out = pl.pallas_call(
        logreg_kernel,
        out_shape=jax.ShapeDtypeStruct((padded_B, 1), jnp.float32),
        grid_spec=pl.GridSpec(
            grid=(n_steps,),
            in_specs=[
                pl.BlockSpec((block_b, D), lambda i: (i, 0)),        # streamed batch tile
                pl.BlockSpec((1, D), lambda i: (0, 0)),              # weight row, VMEM-resident
                pl.BlockSpec(memory_space=pltpu.MemorySpace.SMEM),   # bias scalar in SMEM
            ],
            out_specs=pl.BlockSpec((block_b, 1), lambda i: (i, 0)),
        ),
        compiler_params=pltpu.CompilerParams(
            dimension_semantics=("parallel",),
            vmem_limit_bytes=vmem_limit,
        ),
    )(x, w_row, b_vec)

    return out[:B] if padded_B != B else out


if __name__ == "__main__":
    # Small demo shapes: dim_in = 128 keeps x loads lane-aligned; batch 256 collapses
    # to a single big tile (block_b = B, grid = (1,)) per the perf review.
    B, DIM_IN = 256, 128
    key = jax.random.PRNGKey(0)
    kx, kw, kb = jax.random.split(key, 3)
    x = jax.random.normal(kx, (B, DIM_IN), jnp.float32)
    weight = jax.random.normal(kw, (1, DIM_IN), jnp.float32) * 0.05  # PyTorch (out, in) layout
    bias = jax.random.normal(kb, (1,), jnp.float32) * 0.05

    out = jax.block_until_ready(logistic_regression_forward(x, weight, bias))

    ref = jax.nn.sigmoid(
        jnp.dot(x, weight.T, precision=jax.lax.Precision.HIGHEST) + bias
    )
    assert out.shape == (B, 1)
    assert jnp.allclose(out, ref, atol=1e-5, rtol=1e-5)
    print("KERNEL_OK")
</pallas_src>

<mosaic_0001>
module attributes {stable_mosaic.version = 11 : i64} {
  func.func @logreg_kernel(%arg0: i32, %arg1: memref<256x128xf32, #tpu.memory_space<vmem>>, %arg2: memref<1x128xf32, #tpu.memory_space<vmem>>, %arg3: memref<1xf32, #tpu.memory_space<smem>>, %arg4: memref<256x1xf32, #tpu.memory_space<vmem>>) attributes {dimension_semantics = [#tpu.dimension_semantics<parallel>], iteration_bounds = array<i64: 1>, scalar_prefetch = 0 : i64, scratch_operands = 0 : i64, tpu.core_type = #tpu.core_type<tc>, window_params = [{transform_indices = @transform_0, window_bounds = array<i64: 256, 128>}, {pipeline_mode = #tpu.pipeline_mode<synchronous>, transform_indices = @transform_1, window_bounds = array<i64: 1, 128>}, {transform_indices = @transform_2, window_bounds = array<i64: 1>}, {transform_indices = @transform_3, window_bounds = array<i64: 256, 1>}]} {
    %c0 = arith.constant 0 : index
    %c0_0 = arith.constant 0 : index
    %0 = vector.load %arg1[%c0, %c0_0] : memref<256x128xf32, #tpu.memory_space<vmem>>, vector<256x128xf32>
    %c0_1 = arith.constant 0 : index
    %c0_2 = arith.constant 0 : index
    %1 = vector.load %arg2[%c0_1, %c0_2] : memref<1x128xf32, #tpu.memory_space<vmem>>, vector<1x128xf32>
    %2 = vector.broadcast %1 : vector<1x128xf32> to vector<256x128xf32>
    %3 = arith.mulf %0, %2 : vector<256x128xf32>
    %cst = arith.constant dense<0.000000e+00> : vector<256xf32>
    %4 = vector.multi_reduction <add>, %3, %cst [1] : vector<256x128xf32> to vector<256xf32>
    %5 = vector.shape_cast %4 : vector<256xf32> to vector<256x1xf32>
    %c0_3 = arith.constant 0 : index
    %6 = memref.load %arg3[%c0_3] : memref<1xf32, #tpu.memory_space<smem>>
    %7 = vector.broadcast %6 : f32 to vector<256x1xf32>
    %8 = arith.addf %5, %7 : vector<256x1xf32>
    %9 = arith.negf %8 : vector<256x1xf32>
    %10 = math.exp %9 : vector<256x1xf32>
    %cst_4 = arith.constant 1.000000e+00 : f32
    %11 = vector.broadcast %cst_4 : f32 to vector<256x1xf32>
    %12 = arith.addf %11, %10 : vector<256x1xf32>
    %13 = arith.divf %11, %12 : vector<256x1xf32>
    %c0_5 = arith.constant 0 : index
    %c0_6 = arith.constant 0 : index
    %14 = vector.load %arg4[%c0_5, %c0_6] : memref<256x1xf32, #tpu.memory_space<vmem>>, vector<256x1xf32>
    tpu.vector_store %arg4[%c0_5, %c0_6], %13 {strides = array<i32>} : memref<256x1xf32, #tpu.memory_space<vmem>>, vector<256x1xf32>,
    return
  }
  func.func @transform_0(%arg0: i32) -> (i32, i32) {
    %c0_i32 = arith.constant 0 : i32
    %c0_i32_0 = arith.constant 0 : i32
    return %arg0, %c0_i32 : i32, i32
  }
  func.func @transform_1(%arg0: i32) -> (i32, i32) {
    %c0_i32 = arith.constant 0 : i32
    %c0_i32_0 = arith.constant 0 : i32
    %c0_i32_1 = arith.constant 0 : i32
    return %c0_i32, %c0_i32_0 : i32, i32
  }
  func.func @transform_2(%arg0: i32) -> i32 {
    %c0_i32 = arith.constant 0 : i32
    %c0_i32_0 = arith.constant 0 : i32
    return %c0_i32 : i32
  }
  func.func @transform_3(%arg0: i32) -> (i32, i32) {
    %c0_i32 = arith.constant 0 : i32
    %c0_i32_0 = arith.constant 0 : i32
    return %arg0, %c0_i32 : i32, i32
  }
}

</mosaic_0001>

<llo_original>
// kernel: tpu_custom_call.1
$region0: #{tpu_custom_call.1}
  #allocation0 [shape = 'u32[]', space=smem, size = 0x4, offset = 0x4, fixed_abs, tag = 'smem constant byte address 0x4 - core index']
  #allocation1 [shape = 'u32[72,128]{1,0:T(1,128)}', space=vmem, size = 0x9000, scoped, tag = 'internal scratch']
  #allocation2 [shape = 'f32[1]{0:T(128)S(6)}', space=smem, size = 0x200, scoped, tag = 'scoped memory for tpu_custom_call.1']
  %s0 = inlined_call_operand.hbm [shape: f32[256,128], index: 0, kind: input, shape index: {}]
  %s1 = inlined_call_operand.vmem [shape: f32[1,128], index: 1, kind: input, shape index: {}]
  %s2 = inlined_call_operand.<no memory space> [shape: f32[1], index: 2, kind: input, shape index: {}]
  %s3 = inlined_call_operand.vmem [shape: f32[256,1], index: 3, kind: output, shape index: {}]
  %s4 = sld [smem:[#allocation0]]
  $region26: #{tpu_custom_call.1} parent=0
    _
  %s6 = ssub.s32 1, %s4
  %s7 = scalar_select 0, %s6, %s4
  %8 = sst [smem:[#allocation2]] %s2
  $region1: #{tpu_custom_call.1} parent=0
    #allocation3 [shape = 'u8[131072]{0}', space=vmem, size = 0x20000, scoped, tag = 'input window, operand 0, single buffered']
    #allocation4 [shape = 's32[1]{0}', space=sflag, size = 0x4, scoped, tag = 'scoped memory for tpu_custom_call.1']
    %9 = vsyncpa [#allocation4], 0
    // Predicated region
    $region2: #{tpu_custom_call.1} parent=1 // pred_check
      _
    $region3: #{tpu_custom_call.1} parent=1 // pred_check_branch
      %11 = sbr.rel (0) target = $region5
    $region4: #{tpu_custom_call.1} parent=1 // pred_region
      %13 = vsyncadd [#allocation4], 0
      %s14 = sshll.u32 %s0, 4
      %s15 = int_to_ptr.hbm [resolvable:$true] %s14
      %s16 = sshll.u32 [#allocation3], 4
      %s17 = int_to_ptr.vmem [resolvable:$true] %s16
      %22 = dma.hbm_to_vmem [thread:$0]  %s15, 4096, %s17, [#allocation4], 128, 128, 8
    $region5: #{tpu_custom_call.1} parent=1 // pred_fallthru
      _
    // Predicated region
    $region6: #{tpu_custom_call.1} parent=1 // pred_check
      _
    $region7: #{tpu_custom_call.1} parent=1 // pred_check_branch
      %24 = sbr.rel (0) target = $region9
    $region8: #{tpu_custom_call.1} parent=1 // pred_region
      _
    $region9: #{tpu_custom_call.1} parent=1 // pred_fallthru
      _
    // Predicated region
    $region10: #{tpu_custom_call.1} parent=1 // pred_check
      _
    $region11: #{tpu_custom_call.1} parent=1 // pred_check_branch
      %26 = sbr.rel (0) target = $region13
    $region12: #{tpu_custom_call.1} parent=1 // pred_region
      _
    $region13: #{tpu_custom_call.1} parent=1 // pred_fallthru
      _
    // Predicated region
    $region14: #{tpu_custom_call.1} parent=1 // pred_check
      _
    $region15: #{tpu_custom_call.1} parent=1 // pred_check_branch
      %28 = sbr.rel (0) target = $region17
    $region16: #{tpu_custom_call.1} parent=1 // pred_region
      %30 = dma.done [#allocation4], 4096
    $region17: #{tpu_custom_call.1} parent=1 // pred_fallthru
      _
    %v31 = vld [vmem:[#allocation3] sm:$0xff]
    %v32 = vld [vmem:[#allocation3 + $0x8] sm:$0xff]
    %v33 = vld [vmem:[#allocation3 + $0x10] sm:$0xff]
    %v34 = vld [vmem:[#allocation3 + $0x18] sm:$0xff]
    %v35 = vld [vmem:[#allocation3 + $0x20] sm:$0xff]
    %v36 = vld [vmem:[#allocation3 + $0x28] sm:$0xff]
    %v37 = vld [vmem:[#allocation3 + $0x30] sm:$0xff]
    %v38 = vld [vmem:[#allocation3 + $0x38] sm:$0xff]
    %v39 = vld [vmem:[#allocation3 + $0x40] sm:$0xff]
    %v40 = vld [vmem:[#allocation3 + $0x48] sm:$0xff]
    %v41 = vld [vmem:[#allocation3 + $0x50] sm:$0xff]
    %v42 = vld [vmem:[#allocation3 + $0x58] sm:$0xff]
    %v43 = vld [vmem:[#allocation3 + $0x60] sm:$0xff]
    %v44 = vld [vmem:[#allocation3 + $0x68] sm:$0xff]
    %v45 = vld [vmem:[#allocation3 + $0x70] sm:$0xff]
    %v46 = vld [vmem:[#allocation3 + $0x78] sm:$0xff]
    %v47 = vld [vmem:[#allocation3 + $0x80] sm:$0xff]
    %v48 = vld [vmem:[#allocation3 + $0x88] sm:$0xff]
    %v49 = vld [vmem:[#allocation3 + $0x90] sm:$0xff]
    %v50 = vld [vmem:[#allocation3 + $0x98] sm:$0xff]
    %v51 = vld [vmem:[#allocation3 + $0xa0] sm:$0xff]
    %v52 = vld [vmem:[#allocation3 + $0xa8] sm:$0xff]
    %v53 = vld [vmem:[#allocation3 + $0xb0] sm:$0xff]
    %v54 = vld [vmem:[#allocation3 + $0xb8] sm:$0xff]
    %v55 = vld [vmem:[#allocation3 + $0xc0] sm:$0xff]
    %v56 = vld [vmem:[#allocation3 + $0xc8] sm:$0xff]
    %v57 = vld [vmem:[#allocation3 + $0xd0] sm:$0xff]
    %v58 = vld [vmem:[#allocation3 + $0xd8] sm:$0xff]
    %v59 = vld [vmem:[#allocation3 + $0xe0] sm:$0xff]
    %v60 = vld [vmem:[#allocation3 + $0xe8] sm:$0xff]
    %v61 = vld [vmem:[#allocation3 + $0xf0] sm:$0xff]
    %v62 = vld [vmem:[#allocation3 + $0xf8] sm:$0xff]
    %v63 = vld [vmem:[%s1] sm:$0x1]
    %v65 = vperm.slane %v63, 0
    %v67 = vmul.f32 %v31, %v65
    %v68 = vmul.f32 %v32, %v65
    %v69 = vmul.f32 %v33, %v65
    %v70 = vmul.f32 %v34, %v65
    %v71 = vmul.f32 %v35, %v65
    %v72 = vmul.f32 %v36, %v65
    %v73 = vmul.f32 %v37, %v65
    %v74 = vmul.f32 %v38, %v65
    %v75 = vmul.f32 %v39, %v65
    %v76 = vmul.f32 %v40, %v65
    %v77 = vmul.f32 %v41, %v65
    %v78 = vmul.f32 %v42, %v65
    %v79 = vmul.f32 %v43, %v65
    %v80 = vmul.f32 %v44, %v65
    %v81 = vmul.f32 %v45, %v65
    %v82 = vmul.f32 %v46, %v65
    %v83 = vmul.f32 %v47, %v65
    %v84 = vmul.f32 %v48, %v65
    %v85 = vmul.f32 %v49, %v65
    %v86 = vmul.f32 %v50, %v65
    %v87 = vmul.f32 %v51, %v65
    %v88 = vmul.f32 %v52, %v65
    %v89 = vmul.f32 %v53, %v65
    %v90 = vmul.f32 %v54, %v65
    %v91 = vmul.f32 %v55, %v65
    %v92 = vmul.f32 %v56, %v65
    %v93 = vmul.f32 %v57, %v65
    %v94 = vmul.f32 %v58, %v65
    %v95 = vmul.f32 %v59, %v65
    %v96 = vmul.f32 %v60, %v65
    %v97 = vmul.f32 %v61, %v65
    %v98 = vmul.f32 %v62, %v65
    %99 = vadd.xlane.f32.xlu0 %v67
    %v100 = vpop.xlane.xlu0 %99
    %101 = vadd.xlane.f32.xlu0 %v68
    %v102 = vpop.xlane.xlu0 %101
    %103 = vadd.xlane.f32.xlu0 %v69
    %v104 = vpop.xlane.xlu0 %103
    %105 = vadd.xlane.f32.xlu0 %v70
    %v106 = vpop.xlane.xlu0 %105
    %107 = vadd.xlane.f32.xlu0 %v71
    %v108 = vpop.xlane.xlu0 %107
    %109 = vadd.xlane.f32.xlu0 %v72
    %v110 = vpop.xlane.xlu0 %109
    %111 = vadd.xlane.f32.xlu0 %v73
    %v112 = vpop.xlane.xlu0 %111
    %113 = vadd.xlane.f32.xlu0 %v74
    %v114 = vpop.xlane.xlu0 %113
    %115 = vadd.xlane.f32.xlu0 %v75
    %v116 = vpop.xlane.xlu0 %115
    %117 = vadd.xlane.f32.xlu0 %v76
    %v118 = vpop.xlane.xlu0 %117
    %119 = vadd.xlane.f32.xlu0 %v77
    %v120 = vpop.xlane.xlu0 %119
    %121 = vadd.xlane.f32.xlu0 %v78
    %v122 = vpop.xlane.xlu0 %121
    %123 = vadd.xlane.f32.xlu0 %v79
    %v124 = vpop.xlane.xlu0 %123
    %125 = vadd.xlane.f32.xlu0 %v80
    %v126 = vpop.xlane.xlu0 %125
    %127 = vadd.xlane.f32.xlu0 %v81
    %v128 = vpop.xlane.xlu0 %127
    %129 = vadd.xlane.f32.xlu0 %v82
    %v130 = vpop.xlane.xlu0 %129
    %131 = vadd.xlane.f32.xlu0 %v83
    %v132 = vpop.xlane.xlu0 %131
    %133 = vadd.xlane.f32.xlu0 %v84
    %v134 = vpop.xlane.xlu0 %133
    %135 = vadd.xlane.f32.xlu0 %v85
    %v136 = vpop.xlane.xlu0 %135
    %137 = vadd.xlane.f32.xlu0 %v86
    %v138 = vpop.xlane.xlu0 %137
    %139 = vadd.xlane.f32.xlu0 %v87
    %v140 = vpop.xlane.xlu0 %139
    %141 = vadd.xlane.f32.xlu0 %v88
    %v142 = vpop.xlane.xlu0 %141
    %143 = vadd.xlane.f32.xlu0 %v89
    %v144 = vpop.xlane.xlu0 %143
    %145 = vadd.xlane.f32.xlu0 %v90
    %v146 = vpop.xlane.xlu0 %145
    %147 = vadd.xlane.f32.xlu0 %v91
    %v148 = vpop.xlane.xlu0 %147
    %149 = vadd.xlane.f32.xlu0 %v92
    %v150 = vpop.xlane.xlu0 %149
    %151 = vadd.xlane.f32.xlu0 %v93
    %v152 = vpop.xlane.xlu0 %151
    %153 = vadd.xlane.f32.xlu0 %v94
    %v154 = vpop.xlane.xlu0 %153
    %155 = vadd.xlane.f32.xlu0 %v95
    %v156 = vpop.xlane.xlu0 %155
    %157 = vadd.xlane.f32.xlu0 %v96
    %v158 = vpop.xlane.xlu0 %157
    %159 = vadd.xlane.f32.xlu0 %v97
    %v160 = vpop.xlane.xlu0 %159
    %161 = vadd.xlane.f32.xlu0 %v98
    %v162 = vpop.xlane.xlu0 %161
    %s163 = sld [smem:[#allocation2]]
    %v164 = vstv %s163
    %v165 = vadd.f32 %v100, %v164
    %v166 = vadd.f32 %v102, %v164
    %v167 = vadd.f32 %v104, %v164
    %v168 = vadd.f32 %v106, %v164
    %v169 = vadd.f32 %v108, %v164
    %v170 = vadd.f32 %v110, %v164
    %v171 = vadd.f32 %v112, %v164
    %v172 = vadd.f32 %v114, %v164
    %v173 = vadd.f32 %v116, %v164
    %v174 = vadd.f32 %v118, %v164
    %v175 = vadd.f32 %v120, %v164
    %v176 = vadd.f32 %v122, %v164
    %v177 = vadd.f32 %v124, %v164
    %v178 = vadd.f32 %v126, %v164
    %v179 = vadd.f32 %v128, %v164
    %v180 = vadd.f32 %v130, %v164
    %v181 = vadd.f32 %v132, %v164
    %v182 = vadd.f32 %v134, %v164
    %v183 = vadd.f32 %v136, %v164
    %v184 = vadd.f32 %v138, %v164
    %v185 = vadd.f32 %v140, %v164
    %v186 = vadd.f32 %v142, %v164
    %v187 = vadd.f32 %v144, %v164
    %v188 = vadd.f32 %v146, %v164
    %v189 = vadd.f32 %v148, %v164
    %v190 = vadd.f32 %v150, %v164
    %v191 = vadd.f32 %v152, %v164
    %v192 = vadd.f32 %v154, %v164
    %v193 = vadd.f32 %v156, %v164
    %v194 = vadd.f32 %v158, %v164
    %v195 = vadd.f32 %v160, %v164
    %v196 = vadd.f32 %v162, %v164
    %v197 = vxor.u32 %v165, 2147483648
    %v198 = vxor.u32 %v166, 2147483648
    %v199 = vxor.u32 %v167, 2147483648
    %v200 = vxor.u32 %v168, 2147483648
    %v201 = vxor.u32 %v169, 2147483648
    %v202 = vxor.u32 %v170, 2147483648
    %v203 = vxor.u32 %v171, 2147483648
    %v204 = vxor.u32 %v172, 2147483648
    %v205 = vxor.u32 %v173, 2147483648
    %v206 = vxor.u32 %v174, 2147483648
    %v207 = vxor.u32 %v175, 2147483648
    %v208 = vxor.u32 %v176, 2147483648
    %v209 = vxor.u32 %v177, 2147483648
    %v210 = vxor.u32 %v178, 2147483648
    %v211 = vxor.u32 %v179, 2147483648
    %v212 = vxor.u32 %v180, 2147483648
    %v213 = vxor.u32 %v181, 2147483648
    %v214 = vxor.u32 %v182, 2147483648
    %v215 = vxor.u32 %v183, 2147483648
    %v216 = vxor.u32 %v184, 2147483648
    %v217 = vxor.u32 %v185, 2147483648
    %v218 = vxor.u32 %v186, 2147483648
    %v219 = vxor.u32 %v187, 2147483648
    %v220 = vxor.u32 %v188, 2147483648
    %v221 = vxor.u32 %v189, 2147483648
    %v222 = vxor.u32 %v190, 2147483648
    %v223 = vxor.u32 %v191, 2147483648
    %v224 = vxor.u32 %v192, 2147483648
    %v225 = vxor.u32 %v193, 2147483648
    %v226 = vxor.u32 %v194, 2147483648
    %v227 = vxor.u32 %v195, 2147483648
    %v228 = vxor.u32 %v196, 2147483648
    %v229 = vmul.f32 %v197, 1.442695
    %v230 = vpow.pop %v229
    %v231 = vmul.f32 %v198, 1.442695
    %v232 = vpow.pop %v231
    %v233 = vmul.f32 %v199, 1.442695
    %v234 = vpow.pop %v233
    %v235 = vmul.f32 %v200, 1.442695
    %v236 = vpow.pop %v235
    %v237 = vmul.f32 %v201, 1.442695
    %v238 = vpow.pop %v237
    %v239 = vmul.f32 %v202, 1.442695
    %v240 = vpow.pop %v239
    %v241 = vmul.f32 %v203, 1.442695
    %v242 = vpow.pop %v241
    %v243 = vmul.f32 %v204, 1.442695
    %v244 = vpow.pop %v243
    %v245 = vmul.f32 %v205, 1.442695
    %v246 = vpow.pop %v245
    %v247 = vmul.f32 %v206, 1.442695
    %v248 = vpow.pop %v247
    %v249 = vmul.f32 %v207, 1.442695
    %v250 = vpow.pop %v249
    %v251 = vmul.f32 %v208, 1.442695
    %v252 = vpow.pop %v251
    %v253 = vmul.f32 %v209, 1.442695
    %v254 = vpow.pop %v253
    %v255 = vmul.f32 %v210, 1.442695
    %v256 = vpow.pop %v255
    %v257 = vmul.f32 %v211, 1.442695
    %v258 = vpow.pop %v257
    %v259 = vmul.f32 %v212, 1.442695
    %v260 = vpow.pop %v259
    %v261 = vmul.f32 %v213, 1.442695
    %v262 = vpow.pop %v261
    %v263 = vmul.f32 %v214, 1.442695
    %v264 = vpow.pop %v263
    %v265 = vmul.f32 %v215, 1.442695
    %v266 = vpow.pop %v265
    %v267 = vmul.f32 %v216, 1.442695
    %v268 = vpow.pop %v267
    %v269 = vmul.f32 %v217, 1.442695
    %v270 = vpow.pop %v269
    %v271 = vmul.f32 %v218, 1.442695
    %v272 = vpow.pop %v271
    %v273 = vmul.f32 %v219, 1.442695
    %v274 = vpow.pop %v273
    %v275 = vmul.f32 %v220, 1.442695
    %v276 = vpow.pop %v275
    %v277 = vmul.f32 %v221, 1.442695
    %v278 = vpow.pop %v277
    %v279 = vmul.f32 %v222, 1.442695
    %v280 = vpow.pop %v279
    %v281 = vmul.f32 %v223, 1.442695
    %v282 = vpow.pop %v281
    %v283 = vmul.f32 %v224, 1.442695
    %v284 = vpow.pop %v283
    %v285 = vmul.f32 %v225, 1.442695
    %v286 = vpow.pop %v285
    %v287 = vmul.f32 %v226, 1.442695
    %v288 = vpow.pop %v287
    %v289 = vmul.f32 %v227, 1.442695
    %v290 = vpow.pop %v289
    %v291 = vmul.f32 %v228, 1.442695
    %v292 = vpow.pop %v291
    %v293 = vadd.f32 %v230, 1.0
    %v294 = vadd.f32 %v232, 1.0
    %v295 = vadd.f32 %v234, 1.0
    %v296 = vadd.f32 %v236, 1.0
    %v297 = vadd.f32 %v238, 1.0
    %v298 = vadd.f32 %v240, 1.0
    %v299 = vadd.f32 %v242, 1.0
    %v300 = vadd.f32 %v244, 1.0
    %v301 = vadd.f32 %v246, 1.0
    %v302 = vadd.f32 %v248, 1.0
    %v303 = vadd.f32 %v250, 1.0
    %v304 = vadd.f32 %v252, 1.0
    %v305 = vadd.f32 %v254, 1.0
    %v306 = vadd.f32 %v256, 1.0
    %v307 = vadd.f32 %v258, 1.0
    %v308 = vadd.f32 %v260, 1.0
    %v309 = vadd.f32 %v262, 1.0
    %v310 = vadd.f32 %v264, 1.0
    %v311 = vadd.f32 %v266, 1.0
    %v312 = vadd.f32 %v268, 1.0
    %v313 = vadd.f32 %v270, 1.0
    %v314 = vadd.f32 %v272, 1.0
    %v315 = vadd.f32 %v274, 1.0
    %v316 = vadd.f32 %v276, 1.0
    %v317 = vadd.f32 %v278, 1.0
    %v318 = vadd.f32 %v280, 1.0
    %v319 = vadd.f32 %v282, 1.0
    %v320 = vadd.f32 %v284, 1.0
    %v321 = vadd.f32 %v286, 1.0
    %v322 = vadd.f32 %v288, 1.0
    %v323 = vadd.f32 %v290, 1.0
    %v324 = vadd.f32 %v292, 1.0
    %v325 = vrcp.pop %v293
    %v326 = vmul.f32 %v293, %v325
    %v327 = vsub.f32 1.0, %v326
    %v328 = vmul.f32 %v325, %v327
    %v329 = vadd.f32 %v325, %v328
    %vm330 = vweird.f32 %v293
    %vm331 = vweird.f32 %v325
    %vm332 = vmor %vm330, %vm331
    %v333 = vsel %vm332, %v325, %v329
    %v334 = vand.u32 2147483647, %v293
    %vm335 = vcmp.eq.f32.partialorder %v334, 8.507059e+37
    %v336 = vand.u32 %v293, 2147483648
    %v337 = vor.u32 1.1754944e-38, %v336
    %v338 = vsel %vm335, %v337, %v333
    %v339 = vmul.f32 1.0, %v338
    %v340 = vrcp.pop %v294
    %v341 = vmul.f32 %v294, %v340
    %v342 = vsub.f32 1.0, %v341
    %v343 = vmul.f32 %v340, %v342
    %v344 = vadd.f32 %v340, %v343
    %vm345 = vweird.f32 %v294
    %vm346 = vweird.f32 %v340
    %vm347 = vmor %vm345, %vm346
    %v348 = vsel %vm347, %v340, %v344
    %v349 = vand.u32 2147483647, %v294
    %vm350 = vcmp.eq.f32.partialorder %v349, 8.507059e+37
    %v351 = vand.u32 %v294, 2147483648
    %v352 = vor.u32 1.1754944e-38, %v351
    %v353 = vsel %vm350, %v352, %v348
    %v354 = vmul.f32 1.0, %v353
    %v355 = vrcp.pop %v295
    %v356 = vmul.f32 %v295, %v355
    %v357 = vsub.f32 1.0, %v356
    %v358 = vmul.f32 %v355, %v357
    %v359 = vadd.f32 %v355, %v358
    %vm360 = vweird.f32 %v295
    %vm361 = vweird.f32 %v355
    %vm362 = vmor %vm360, %vm361
    %v363 = vsel %vm362, %v355, %v359
    %v364 = vand.u32 2147483647, %v295
    %vm365 = vcmp.eq.f32.partialorder %v364, 8.507059e+37
    %v366 = vand.u32 %v295, 2147483648
    %v367 = vor.u32 1.1754944e-38, %v366
    %v368 = vsel %vm365, %v367, %v363
    %v369 = vmul.f32 1.0, %v368
    %v370 = vrcp.pop %v296
    %v371 = vmul.f32 %v296, %v370
    %v372 = vsub.f32 1.0, %v371
    %v373 = vmul.f32 %v370, %v372
    %v374 = vadd.f32 %v370, %v373
    %vm375 = vweird.f32 %v296
    %vm376 = vweird.f32 %v370
    %vm377 = vmor %vm375, %vm376
    %v378 = vsel %vm377, %v370, %v374
    %v379 = vand.u32 2147483647, %v296
    %vm380 = vcmp.eq.f32.partialorder %v379, 8.507059e+37
    %v381 = vand.u32 %v296, 2147483648
    %v382 = vor.u32 1.1754944e-38, %v381
    %v383 = vsel %vm380, %v382, %v378
    %v384 = vmul.f32 1.0, %v383
    %v385 = vrcp.pop %v297
    %v386 = vmul.f32 %v297, %v385
    %v387 = vsub.f32 1.0, %v386
    %v388 = vmul.f32 %v385, %v387
    %v389 = vadd.f32 %v385, %v388
    %vm390 = vweird.f32 %v297
    %vm391 = vweird.f32 %v385
    %vm392 = vmor %vm390, %vm391
    %v393 = vsel %vm392, %v385, %v389
    %v394 = vand.u32 2147483647, %v297
    %vm395 = vcmp.eq.f32.partialorder %v394, 8.507059e+37
    %v396 = vand.u32 %v297, 2147483648
    %v397 = vor.u32 1.1754944e-38, %v396
    %v398 = vsel %vm395, %v397, %v393
    %v399 = vmul.f32 1.0, %v398
    %v400 = vrcp.pop %v298
    %v401 = vmul.f32 %v298, %v400
    %v402 = vsub.f32 1.0, %v401
    %v403 = vmul.f32 %v400, %v402
    %v404 = vadd.f32 %v400, %v403
    %vm405 = vweird.f32 %v298
    %vm406 = vweird.f32 %v400
    %vm407 = vmor %vm405, %vm406
    %v408 = vsel %vm407, %v400, %v404
    %v409 = vand.u32 2147483647, %v298
    %vm410 = vcmp.eq.f32.partialorder %v409, 8.507059e+37
    %v411 = vand.u32 %v298, 2147483648
    %v412 = vor.u32 1.1754944e-38, %v411
    %v413 = vsel %vm410, %v412, %v408
    %v414 = vmul.f32 1.0, %v413
    %v415 = vrcp.pop %v299
    %v416 = vmul.f32 %v299, %v415
    %v417 = vsub.f32 1.0, %v416
    %v418 = vmul.f32 %v415, %v417
    %v419 = vadd.f32 %v415, %v418
    %vm420 = vweird.f32 %v299
    %vm421 = vweird.f32 %v415
    %vm422 = vmor %vm420, %vm421
    %v423 = vsel %vm422, %v415, %v419
    %v424 = vand.u32 2147483647, %v299
    %vm425 = vcmp.eq.f32.partialorder %v424, 8.507059e+37
    %v426 = vand.u32 %v299, 2147483648
    %v427 = vor.u32 1.1754944e-38, %v426
    %v428 = vsel %vm425, %v427, %v423
    %v429 = vmul.f32 1.0, %v428
    %v430 = vrcp.pop %v300
    %v431 = vmul.f32 %v300, %v430
    %v432 = vsub.f32 1.0, %v431
    %v433 = vmul.f32 %v430, %v432
    %v434 = vadd.f32 %v430, %v433
    %vm435 = vweird.f32 %v300
    %vm436 = vweird.f32 %v430
    %vm437 = vmor %vm435, %vm436
    %v438 = vsel %vm437, %v430, %v434
    %v439 = vand.u32 2147483647, %v300
    %vm440 = vcmp.eq.f32.partialorder %v439, 8.507059e+37
    %v441 = vand.u32 %v300, 2147483648
    %v442 = vor.u32 1.1754944e-38, %v441
    %v443 = vsel %vm440, %v442, %v438
    %v444 = vmul.f32 1.0, %v443
    %v445 = vrcp.pop %v301
    %v446 = vmul.f32 %v301, %v445
    %v447 = vsub.f32 1.0, %v446
    %v448 = vmul.f32 %v445, %v447
    %v449 = vadd.f32 %v445, %v448
    %vm450 = vweird.f32 %v301
    %vm451 = vweird.f32 %v445
    %vm452 = vmor %vm450, %vm451
    %v453 = vsel %vm452, %v445, %v449
    %v454 = vand.u32 2147483647, %v301
    %vm455 = vcmp.eq.f32.partialorder %v454, 8.507059e+37
    %v456 = vand.u32 %v301, 2147483648
    %v457 = vor.u32 1.1754944e-38, %v456
    %v458 = vsel %vm455, %v457, %v453
    %v459 = vmul.f32 1.0, %v458
    %v460 = vrcp.pop %v302
    %v461 = vmul.f32 %v302, %v460
    %v462 = vsub.f32 1.0, %v461
    %v463 = vmul.f32 %v460, %v462
    %v464 = vadd.f32 %v460, %v463
    %vm465 = vweird.f32 %v302
    %vm466 = vweird.f32 %v460
    %vm467 = vmor %vm465, %vm466
    %v468 = vsel %vm467, %v460, %v464
    %v469 = vand.u32 2147483647, %v302
    %vm470 = vcmp.eq.f32.partialorder %v469, 8.507059e+37
    %v471 = vand.u32 %v302, 2147483648
    %v472 = vor.u32 1.1754944e-38, %v471
    %v473 = vsel %vm470, %v472, %v468
    %v474 = vmul.f32 1.0, %v473
    %v475 = vrcp.pop %v303
    %v476 = vmul.f32 %v303, %v475
    %v477 = vsub.f32 1.0, %v476
    %v478 = vmul.f32 %v475, %v477
    %v479 = vadd.f32 %v475, %v478
    %vm480 = vweird.f32 %v303
    %vm481 = vweird.f32 %v475
    %vm482 = vmor %vm480, %vm481
    %v483 = vsel %vm482, %v475, %v479
    %v484 = vand.u32 2147483647, %v303
    %vm485 = vcmp.eq.f32.partialorder %v484, 8.507059e+37
    %v486 = vand.u32 %v303, 2147483648
    %v487 = vor.u32 1.1754944e-38, %v486
    %v488 = vsel %vm485, %v487, %v483
    %v489 = vmul.f32 1.0, %v488
    %v490 = vrcp.pop %v304
    %v491 = vmul.f32 %v304, %v490
    %v492 = vsub.f32 1.0, %v491
    %v493 = vmul.f32 %v490, %v492
    %v494 = vadd.f32 %v490, %v493
    %vm495 = vweird.f32 %v304
    %vm496 = vweird.f32 %v490
    %vm497 = vmor %vm495, %vm496
    %v498 = vsel %vm497, %v490, %v494
    %v499 = vand.u32 2147483647, %v304
    %vm500 = vcmp.eq.f32.partialorder %v499, 8.507059e+37
    %v501 = vand.u32 %v304, 2147483648
    %v502 = vor.u32 1.1754944e-38, %v501
    %v503 = vsel %vm500, %v502, %v498
    %v504 = vmul.f32 1.0, %v503
    %v505 = vrcp.pop %v305
    %v506 = vmul.f32 %v305, %v505
    %v507 = vsub.f32 1.0, %v506
    %v508 = vmul.f32 %v505, %v507
    %v509 = vadd.f32 %v505, %v508
    %vm510 = vweird.f32 %v305
    %vm511 = vweird.f32 %v505
    %vm512 = vmor %vm510, %vm511
    %v513 = vsel %vm512, %v505, %v509
    %v514 = vand.u32 2147483647, %v305
    %vm515 = vcmp.eq.f32.partialorder %v514, 8.507059e+37
    %v516 = vand.u32 %v305, 2147483648
    %v517 = vor.u32 1.1754944e-38, %v516
    %v518 = vsel %vm515, %v517, %v513
    %v519 = vmul.f32 1.0, %v518
    %v520 = vrcp.pop %v306
    %v521 = vmul.f32 %v306, %v520
    %v522 = vsub.f32 1.0, %v521
    %v523 = vmul.f32 %v520, %v522
    %v524 = vadd.f32 %v520, %v523
    %vm525 = vweird.f32 %v306
    %vm526 = vweird.f32 %v520
    %vm527 = vmor %vm525, %vm526
    %v528 = vsel %vm527, %v520, %v524
    %v529 = vand.u32 2147483647, %v306
    %vm530 = vcmp.eq.f32.partialorder %v529, 8.507059e+37
    %v531 = vand.u32 %v306, 2147483648
    %v532 = vor.u32 1.1754944e-38, %v531
    %v533 = vsel %vm530, %v532, %v528
    %v534 = vmul.f32 1.0, %v533
    %v535 = vrcp.pop %v307
    %v536 = vmul.f32 %v307, %v535
    %v537 = vsub.f32 1.0, %v536
    %v538 = vmul.f32 %v535, %v537
    %v539 = vadd.f32 %v535, %v538
    %vm540 = vweird.f32 %v307
    %vm541 = vweird.f32 %v535
    %vm542 = vmor %vm540, %vm541
    %v543 = vsel %vm542, %v535, %v539
    %v544 = vand.u32 2147483647, %v307
    %vm545 = vcmp.eq.f32.partialorder %v544, 8.507059e+37
    %v546 = vand.u32 %v307, 2147483648
    %v547 = vor.u32 1.1754944e-38, %v546
    %v548 = vsel %vm545, %v547, %v543
    %v549 = vmul.f32 1.0, %v548
    %v550 = vrcp.pop %v308
    %v551 = vmul.f32 %v308, %v550
    %v552 = vsub.f32 1.0, %v551
    %v553 = vmul.f32 %v550, %v552
    %v554 = vadd.f32 %v550, %v553
    %vm555 = vweird.f32 %v308
    %vm556 = vweird.f32 %v550
    %vm557 = vmor %vm555, %vm556
    %v558 = vsel %vm557, %v550, %v554
    %v559 = vand.u32 2147483647, %v308
    %vm560 = vcmp.eq.f32.partialorder %v559, 8.507059e+37
    %v561 = vand.u32 %v308, 2147483648
    %v562 = vor.u32 1.1754944e-38, %v561
    %v563 = vsel %vm560, %v562, %v558
    %v564 = vmul.f32 1.0, %v563
    %v565 = vrcp.pop %v309
    %v566 = vmul.f32 %v309, %v565
    %v567 = vsub.f32 1.0, %v566
    %v568 = vmul.f32 %v565, %v567
    %v569 = vadd.f32 %v565, %v568
    %vm570 = vweird.f32 %v309
    %vm571 = vweird.f32 %v565
    %vm572 = vmor %vm570, %vm571
    %v573 = vsel %vm572, %v565, %v569
    %v574 = vand.u32 2147483647, %v309
    %vm575 = vcmp.eq.f32.partialorder %v574, 8.507059e+37
    %v576 = vand.u32 %v309, 2147483648
    %v577 = vor.u32 1.1754944e-38, %v576
    %v578 = vsel %vm575, %v577, %v573
    %v579 = vmul.f32 1.0, %v578
    %v580 = vrcp.pop %v310
    %v581 = vmul.f32 %v310, %v580
    %v582 = vsub.f32 1.0, %v581
    %v583 = vmul.f32 %v580, %v582
    %v584 = vadd.f32 %v580, %v583
    %vm585 = vweird.f32 %v310
    %vm586 = vweird.f32 %v580
    %vm587 = vmor %vm585, %vm586
    %v588 = vsel %vm587, %v580, %v584
    %v589 = vand.u32 2147483647, %v310
    %vm590 = vcmp.eq.f32.partialorder %v589, 8.507059e+37
    %v591 = vand.u32 %v310, 2147483648
    %v592 = vor.u32 1.1754944e-38, %v591
    %v593 = vsel %vm590, %v592, %v588
    %v594 = vmul.f32 1.0, %v593
    %v595 = vrcp.pop %v311
    %v596 = vmul.f32 %v311, %v595
    %v597 = vsub.f32 1.0, %v596
    %v598 = vmul.f32 %v595, %v597
    %v599 = vadd.f32 %v595, %v598
    %vm600 = vweird.f32 %v311
    %vm601 = vweird.f32 %v595
    %vm602 = vmor %vm600, %vm601
    %v603 = vsel %vm602, %v595, %v599
    %v604 = vand.u32 2147483647, %v311
    %vm605 = vcmp.eq.f32.partialorder %v604, 8.507059e+37
    %v606 = vand.u32 %v311, 2147483648
    %v607 = vor.u32 1.1754944e-38, %v606
    %v608 = vsel %vm605, %v607, %v603
    %v609 = vmul.f32 1.0, %v608
    %v610 = vrcp.pop %v312
    %v611 = vmul.f32 %v312, %v610
    %v612 = vsub.f32 1.0, %v611
    %v613 = vmul.f32 %v610, %v612
    %v614 = vadd.f32 %v610, %v613
    %vm615 = vweird.f32 %v312
    %vm616 = vweird.f32 %v610
    %vm617 = vmor %vm615, %vm616
    %v618 = vsel %vm617, %v610, %v614
    %v619 = vand.u32 2147483647, %v312
    %vm620 = vcmp.eq.f32.partialorder %v619, 8.507059e+37
    %v621 = vand.u32 %v312, 2147483648
    %v622 = vor.u32 1.1754944e-38, %v621
    %v623 = vsel %vm620, %v622, %v618
    %v624 = vmul.f32 1.0, %v623
    %v625 = vrcp.pop %v313
    %v626 = vmul.f32 %v313, %v625
    %v627 = vsub.f32 1.0, %v626
    %v628 = vmul.f32 %v625, %v627
    %v629 = vadd.f32 %v625, %v628
    %vm630 = vweird.f32 %v313
    %vm631 = vweird.f32 %v625
    %vm632 = vmor %vm630, %vm631
    %v633 = vsel %vm632, %v625, %v629
    %v634 = vand.u32 2147483647, %v313
    %vm635 = vcmp.eq.f32.partialorder %v634, 8.507059e+37
    %v636 = vand.u32 %v313, 2147483648
    %v637 = vor.u32 1.1754944e-38, %v636
    %v638 = vsel %vm635, %v637, %v633
    %v639 = vmul.f32 1.0, %v638
    %v640 = vrcp.pop %v314
    %v641 = vmul.f32 %v314, %v640
    %v642 = vsub.f32 1.0, %v641
    %v643 = vmul.f32 %v640, %v642
    %v644 = vadd.f32 %v640, %v643
    %vm645 = vweird.f32 %v314
    %vm646 = vweird.f32 %v640
    %vm647 = vmor %vm645, %vm646
    %v648 = vsel %vm647, %v640, %v644
    %v649 = vand.u32 2147483647, %v314
    %vm650 = vcmp.eq.f32.partialorder %v649, 8.507059e+37
    %v651 = vand.u32 %v314, 2147483648
    %v652 = vor.u32 1.1754944e-38, %v651
    %v653 = vsel %vm650, %v652, %v648
    %v654 = vmul.f32 1.0, %v653
    %v655 = vrcp.pop %v315
    %v656 = vmul.f32 %v315, %v655
    %v657 = vsub.f32 1.0, %v656
    %v658 = vmul.f32 %v655, %v657
    %v659 = vadd.f32 %v655, %v658
    %vm660 = vweird.f32 %v315
    %vm661 = vweird.f32 %v655
    %vm662 = vmor %vm660, %vm661
    %v663 = vsel %vm662, %v655, %v659
    %v664 = vand.u32 2147483647, %v315
    %vm665 = vcmp.eq.f32.partialorder %v664, 8.507059e+37
    %v666 = vand.u32 %v315, 2147483648
    %v667 = vor.u32 1.1754944e-38, %v666
    %v668 = vsel %vm665, %v667, %v663
    %v669 = vmul.f32 1.0, %v668
    %v670 = vrcp.pop %v316
    %v671 = vmul.f32 %v316, %v670
    %v672 = vsub.f32 1.0, %v671
    %v673 = vmul.f32 %v670, %v672
    %v674 = vadd.f32 %v670, %v673
    %vm675 = vweird.f32 %v316
    %vm676 = vweird.f32 %v670
    %vm677 = vmor %vm675, %vm676
    %v678 = vsel %vm677, %v670, %v674
    %v679 = vand.u32 2147483647, %v316
    %vm680 = vcmp.eq.f32.partialorder %v679, 8.507059e+37
    %v681 = vand.u32 %v316, 2147483648
    %v682 = vor.u32 1.1754944e-38, %v681
    %v683 = vsel %vm680, %v682, %v678
    %v684 = vmul.f32 1.0, %v683
    %v685 = vrcp.pop %v317
    %v686 = vmul.f32 %v317, %v685
    %v687 = vsub.f32 1.0, %v686
    %v688 = vmul.f32 %v685, %v687
    %v689 = vadd.f32 %v685, %v688
    %vm690 = vweird.f32 %v317
    %vm691 = vweird.f32 %v685
    %vm692 = vmor %vm690, %vm691
    %v693 = vsel %vm692, %v685, %v689
    %v694 = vand.u32 2147483647, %v317
    %vm695 = vcmp.eq.f32.partialorder %v694, 8.507059e+37
    %v696 = vand.u32 %v317, 2147483648
    %v697 = vor.u32 1.1754944e-38, %v696
    %v698 = vsel %vm695, %v697, %v693
    %v699 = vmul.f32 1.0, %v698
    %v700 = vrcp.pop %v318
    %v701 = vmul.f32 %v318, %v700
    %v702 = vsub.f32 1.0, %v701
    %v703 = vmul.f32 %v700, %v702
    %v704 = vadd.f32 %v700, %v703
    %vm705 = vweird.f32 %v318
    %vm706 = vweird.f32 %v700
    %vm707 = vmor %vm705, %vm706
    %v708 = vsel %vm707, %v700, %v704
    %v709 = vand.u32 2147483647, %v318
    %vm710 = vcmp.eq.f32.partialorder %v709, 8.507059e+37
    %v711 = vand.u32 %v318, 2147483648
    %v712 = vor.u32 1.1754944e-38, %v711
    %v713 = vsel %vm710, %v712, %v708
    %v714 = vmul.f32 1.0, %v713
    %v715 = vrcp.pop %v319
    %v716 = vmul.f32 %v319, %v715
    %v717 = vsub.f32 1.0, %v716
    %v718 = vmul.f32 %v715, %v717
    %v719 = vadd.f32 %v715, %v718
    %vm720 = vweird.f32 %v319
    %vm721 = vweird.f32 %v715
    %vm722 = vmor %vm720, %vm721
    %v723 = vsel %vm722, %v715, %v719
    %v724 = vand.u32 2147483647, %v319
    %vm725 = vcmp.eq.f32.partialorder %v724, 8.507059e+37
    %v726 = vand.u32 %v319, 2147483648
    %v727 = vor.u32 1.1754944e-38, %v726
    %v728 = vsel %vm725, %v727, %v723
    %v729 = vmul.f32 1.0, %v728
    %v730 = vrcp.pop %v320
    %v731 = vmul.f32 %v320, %v730
    %v732 = vsub.f32 1.0, %v731
    %v733 = vmul.f32 %v730, %v732
    %v734 = vadd.f32 %v730, %v733
    %vm735 = vweird.f32 %v320
    %vm736 = vweird.f32 %v730
    %vm737 = vmor %vm735, %vm736
    %v738 = vsel %vm737, %v730, %v734
    %v739 = vand.u32 2147483647, %v320
    %vm740 = vcmp.eq.f32.partialorder %v739, 8.507059e+37
    %v741 = vand.u32 %v320, 2147483648
    %v742 = vor.u32 1.1754944e-38, %v741
    %v743 = vsel %vm740, %v742, %v738
    %v744 = vmul.f32 1.0, %v743
    %v745 = vrcp.pop %v321
    %v746 = vmul.f32 %v321, %v745
    %v747 = vsub.f32 1.0, %v746
    %v748 = vmul.f32 %v745, %v747
    %v749 = vadd.f32 %v745, %v748
    %vm750 = vweird.f32 %v321
    %vm751 = vweird.f32 %v745
    %vm752 = vmor %vm750, %vm751
    %v753 = vsel %vm752, %v745, %v749
    %v754 = vand.u32 2147483647, %v321
    %vm755 = vcmp.eq.f32.partialorder %v754, 8.507059e+37
    %v756 = vand.u32 %v321, 2147483648
    %v757 = vor.u32 1.1754944e-38, %v756
    %v758 = vsel %vm755, %v757, %v753
    %v759 = vmul.f32 1.0, %v758
    %v760 = vrcp.pop %v322
    %v761 = vmul.f32 %v322, %v760
    %v762 = vsub.f32 1.0, %v761
    %v763 = vmul.f32 %v760, %v762
    %v764 = vadd.f32 %v760, %v763
    %vm765 = vweird.f32 %v322
    %vm766 = vweird.f32 %v760
    %vm767 = vmor %vm765, %vm766
    %v768 = vsel %vm767, %v760, %v764
    %v769 = vand.u32 2147483647, %v322
    %vm770 = vcmp.eq.f32.partialorder %v769, 8.507059e+37
    %v771 = vand.u32 %v322, 2147483648
    %v772 = vor.u32 1.1754944e-38, %v771
    %v773 = vsel %vm770, %v772, %v768
    %v774 = vmul.f32 1.0, %v773
    %v775 = vrcp.pop %v323
    %v776 = vmul.f32 %v323, %v775
    %v777 = vsub.f32 1.0, %v776
    %v778 = vmul.f32 %v775, %v777
    %v779 = vadd.f32 %v775, %v778
    %vm780 = vweird.f32 %v323
    %vm781 = vweird.f32 %v775
    %vm782 = vmor %vm780, %vm781
    %v783 = vsel %vm782, %v775, %v779
    %v784 = vand.u32 2147483647, %v323
    %vm785 = vcmp.eq.f32.partialorder %v784, 8.507059e+37
    %v786 = vand.u32 %v323, 2147483648
    %v787 = vor.u32 1.1754944e-38, %v786
    %v788 = vsel %vm785, %v787, %v783
    %v789 = vmul.f32 1.0, %v788
    %v790 = vrcp.pop %v324
    %v791 = vmul.f32 %v324, %v790
    %v792 = vsub.f32 1.0, %v791
    %v793 = vmul.f32 %v790, %v792
    %v794 = vadd.f32 %v790, %v793
    %vm795 = vweird.f32 %v324
    %vm796 = vweird.f32 %v790
    %vm797 = vmor %vm795, %vm796
    %v798 = vsel %vm797, %v790, %v794
    %v799 = vand.u32 2147483647, %v324
    %vm800 = vcmp.eq.f32.partialorder %v799, 8.507059e+37
    %v801 = vand.u32 %v324, 2147483648
    %v802 = vor.u32 1.1754944e-38, %v801
    %v803 = vsel %vm800, %v802, %v798
    %v804 = vmul.f32 1.0, %v803
    %vm805 = vcmask 7168
    %806 = vst.msk [vmem:[%s3] sm:$0xff] %vm805, %v339
    %807 = vst.msk [vmem:[%s3 + $0x8] sm:$0xff] %vm805, %v354
    %808 = vst.msk [vmem:[%s3 + $0x10] sm:$0xff] %vm805, %v369
    %809 = vst.msk [vmem:[%s3 + $0x18] sm:$0xff] %vm805, %v384
    %810 = vst.msk [vmem:[%s3 + $0x20] sm:$0xff] %vm805, %v399
    %811 = vst.msk [vmem:[%s3 + $0x28] sm:$0xff] %vm805, %v414
    %812 = vst.msk [vmem:[%s3 + $0x30] sm:$0xff] %vm805, %v429
    %813 = vst.msk [vmem:[%s3 + $0x38] sm:$0xff] %vm805, %v444
    %814 = vst.msk [vmem:[%s3 + $0x40] sm:$0xff] %vm805, %v459
    %815 = vst.msk [vmem:[%s3 + $0x48] sm:$0xff] %vm805, %v474
    %816 = vst.msk [vmem:[%s3 + $0x50] sm:$0xff] %vm805, %v489
    %817 = vst.msk [vmem:[%s3 + $0x58] sm:$0xff] %vm805, %v504
    %818 = vst.msk [vmem:[%s3 + $0x60] sm:$0xff] %vm805, %v519
    %819 = vst.msk [vmem:[%s3 + $0x68] sm:$0xff] %vm805, %v534
    %820 = vst.msk [vmem:[%s3 + $0x70] sm:$0xff] %vm805, %v549
    %821 = vst.msk [vmem:[%s3 + $0x78] sm:$0xff] %vm805, %v564
    %822 = vst.msk [vmem:[%s3 + $0x80] sm:$0xff] %vm805, %v579
    %823 = vst.msk [vmem:[%s3 + $0x88] sm:$0xff] %vm805, %v594
    %824 = vst.msk [vmem:[%s3 + $0x90] sm:$0xff] %vm805, %v609
    %825 = vst.msk [vmem:[%s3 + $0x98] sm:$0xff] %vm805, %v624
    %826 = vst.msk [vmem:[%s3 + $0xa0] sm:$0xff] %vm805, %v639
    %827 = vst.msk [vmem:[%s3 + $0xa8] sm:$0xff] %vm805, %v654
    %828 = vst.msk [vmem:[%s3 + $0xb0] sm:$0xff] %vm805, %v669
    %829 = vst.msk [vmem:[%s3 + $0xb8] sm:$0xff] %vm805, %v684
    %830 = vst.msk [vmem:[%s3 + $0xc0] sm:$0xff] %vm805, %v699
    %831 = vst.msk [vmem:[%s3 + $0xc8] sm:$0xff] %vm805, %v714
    %832 = vst.msk [vmem:[%s3 + $0xd0] sm:$0xff] %vm805, %v729
    %833 = vst.msk [vmem:[%s3 + $0xd8] sm:$0xff] %vm805, %v744
    %834 = vst.msk [vmem:[%s3 + $0xe0] sm:$0xff] %vm805, %v759
    %835 = vst.msk [vmem:[%s3 + $0xe8] sm:$0xff] %vm805, %v774
    %836 = vst.msk [vmem:[%s3 + $0xf0] sm:$0xff] %vm805, %v789
    %837 = vst.msk [vmem:[%s3 + $0xf8] sm:$0xff] %vm805, %v804
    // Predicated region
    $region18: #{tpu_custom_call.1} parent=1 // pred_check
      _
    $region19: #{tpu_custom_call.1} parent=1 // pred_check_branch
      %839 = sbr.rel (0) target = $region21
    $region20: #{tpu_custom_call.1} parent=1 // pred_region
      _
    $region21: #{tpu_custom_call.1} parent=1 // pred_fallthru
      _
    // Predicated region
    $region22: #{tpu_custom_call.1} parent=1 // pred_check
      _
    $region23: #{tpu_custom_call.1} parent=1 // pred_check_branch
      %841 = sbr.rel (0) target = $region25
    $region24: #{tpu_custom_call.1} parent=1 // pred_region
      _
    $region25: #{tpu_custom_call.1} parent=1 // pred_fallthru
      _
    %842 = vsyncpa [#allocation4], 1

</llo_original>
